<compile_context>
chip_gen: v7x
topology: tpu7x:2x2x1
jax: 0.10.0
libtpu: 0.0.40
codegen_flags: <defaults>
</compile_context>

<pallas_src>
import functools

import jax
import jax.numpy as jnp
from jax.experimental import pallas as pl
from jax.experimental.pallas import tpu as pltpu

LN_EPS = 1e-5            # PyTorch nn.LayerNorm default
_MAX_PMAT_WIDTH = 1024   # use dense P = pool @ bcast for the mean when
                         # C <= 1024 (P is C*C*4 bytes; keep it VMEM-cheap)


def _is_policy(ss):
    return len(ss) == 4 and (not ss[2])


def _round_up(x, m):
    return ((x + m - 1) // m) * m


def split_obs(obs, split_shape):
    start = 0
    pieces = []
    for ss in split_shape:
        n = ss[0] * ss[1]
        pieces.append(obs[:, start:start + n])
        start += n
    return pieces


# ---------------- static layout / config ----------------

def build_config(split_shape, d_model):
    """Where each (segment, slice) lives in the fused slabs (all static ints)."""
    total_in = sum(ss[0] * ss[1] for ss in split_shape)
    total_k = sum(ss[0] for ss in split_shape)
    c_out = total_k * d_model              # fused output width (unpadded)
    g_cols = _round_up(total_k, 128)       # lane-dense pooling column count

    lin_slices = []   # (in_off, L, group)
    pol_slices = []   # (in_col, n_embed, e_off, group)
    in_off = 0
    group = 0
    e_total = 0
    for ss in split_shape:
        K, L = ss[0], ss[1]
        if _is_policy(ss):
            assert L == 1, "policy-id segments must have L == 1"
            n_embed = ss[3]
            for j in range(K):
                pol_slices.append((in_off + j, n_embed, e_total, group))
                e_total += n_embed
                group += 1
        else:
            for j in range(K):
                lin_slices.append((in_off + j * L, L, group))
                group += 1
        in_off += K * L
    assert group == total_k and in_off == total_in
    return dict(total_in=total_in, total_k=total_k, d_model=d_model,
                c_out=c_out, g_cols=g_cols, e_total=e_total,
                lin_slices=lin_slices, pol_slices=pol_slices,
                use_p=c_out <= _MAX_PMAT_WIDTH)


# ---------------- parameter init (deterministic, synthetic) ----------------

def init_params(key, split_shape, d_model):
    params = {}
    gain = 2.0 ** 0.5  # nn.init.calculate_gain('relu')
    for i, ss in enumerate(split_shape):
        key, k1 = jax.random.split(key)
        if _is_policy(ss):
            params[f"fc_{i}"] = {
                "table": jax.random.normal(k1, (ss[3], d_model), jnp.float32)}
        else:
            L = ss[1]
            W = jax.nn.initializers.orthogonal(scale=gain)(k1, (L, d_model),
                                                           jnp.float32)
            params[f"fc_{i}"] = {
                "W": W,
                "b": jnp.zeros((d_model,), jnp.float32),
                "gamma": jnp.ones((d_model,), jnp.float32),
                "beta": jnp.zeros((d_model,), jnp.float32)}
    return params


def pack_params(params, split_shape, cfg):
    """Pack per-segment weights into the fused slabs used by the one kernel."""
    D = cfg["d_model"]
    C = cfg["c_out"]
    w_bd = jnp.zeros((cfg["total_in"], C), jnp.float32)
    bgb = jnp.zeros((3, C), jnp.float32)             # rows: bias, gamma, beta
    w_emb = jnp.zeros((max(cfg["e_total"], 1), C), jnp.float32)

    lin_iter = iter(cfg["lin_slices"])
    pol_iter = iter(cfg["pol_slices"])
    for i, ss in enumerate(split_shape):
        K = ss[0]
        p = params[f"fc_{i}"]
        if _is_policy(ss):
            for _ in range(K):
                _col, n_emb, e_off, g = next(pol_iter)
                w_emb = w_emb.at[e_off:e_off + n_emb,
                                 g * D:(g + 1) * D].set(p["table"])
                # gamma/beta stay 0 for policy groups -> LN path contributes 0
        else:
            for _ in range(K):
                off, L, g = next(lin_iter)
                w_bd = w_bd.at[off:off + L, g * D:(g + 1) * D].set(p["W"])
                bgb = bgb.at[0, g * D:(g + 1) * D].set(p["b"])
                bgb = bgb.at[1, g * D:(g + 1) * D].set(p["gamma"])
                bgb = bgb.at[2, g * D:(g + 1) * D].set(p["beta"])

    # Group-pooling matrices for the per-group LayerNorm (no in-kernel
    # reshape).  G is padded to a multiple of 128 so the (TB, G) var/rsqrt
    # intermediate is lane-dense (costs nothing extra: VMEM pads lanes to 128
    # anyway).  P = pool @ bcast gives the mean in ONE full-lane matmul.
    G = cfg["g_cols"]
    grp_of_lane = jnp.arange(C, dtype=jnp.int32) // D
    eye = (grp_of_lane[:, None] == jnp.arange(G, dtype=jnp.int32)[None, :])
    pool = eye.astype(jnp.float32) / float(D)          # (C, G)
    bcast = eye.astype(jnp.float32).T                  # (G, C)

    packed = dict(
        w_bd=w_bd.astype(jnp.bfloat16),   # bf16 weight slab, f32 accumulate
        bgb=bgb,                          # f32: LN affine + bias stay exact
        w_emb=w_emb.astype(jnp.bfloat16),
        pool=pool, bcast=bcast)
    if cfg["use_p"]:
        packed["pmat"] = pool @ bcast                  # (C, C) f32
    return packed


# ---------------- the single fused Pallas kernel ----------------

def _fused_embedding_kernel(pol_slices, e_rows, use_p, *refs):
    if use_p:
        (x_ref, wbd_ref, bgb_ref, pmat_ref, pool_ref, bcast_ref, wemb_ref,
         o_ref) = refs
    else:
        x_ref, wbd_ref, bgb_ref, pool_ref, bcast_ref, wemb_ref, o_ref = refs
        pmat_ref = None

    # x:(TB,total_in) f32   wbd:(total_in,C) bf16   bgb:(3,C) f32
    # pmat:(C,C) f32        pool:(C,G) f32          bcast:(G,C) f32
    # wemb:(e_rows,C) bf16  o:(TB,C) f32
    x = x_ref[...]
    bgb = bgb_ref[...]
    bias, gamma, beta = bgb[0:1, :], bgb[1:2, :], bgb[2:3, :]

    # One block-diagonal matmul = every per-slice Linear at once (bf16 MXU,
    # f32 accumulation).
    h = jnp.dot(x.astype(wbd_ref.dtype), wbd_ref[...],
                preferred_element_type=jnp.float32)
    h = jnp.maximum(h + bias, 0.0)                     # ReLU (activation_id=1)

    # Per-slot LayerNorm over d_model via lane-dense group-pooling matmuls.
    if use_p:
        mean = jnp.dot(h, pmat_ref[...], preferred_element_type=jnp.float32)
    else:
        mean = jnp.dot(
            jnp.dot(h, pool_ref[...], preferred_element_type=jnp.float32),
            bcast_ref[...], preferred_element_type=jnp.float32)
    d = h - mean
    var_g = jnp.dot(d * d, pool_ref[...],
                    preferred_element_type=jnp.float32)          # (TB, G)
    inv_g = jax.lax.rsqrt(var_g + LN_EPS)     # rsqrt at group resolution only
    inv = jnp.dot(inv_g, bcast_ref[...], preferred_element_type=jnp.float32)
    out = d * inv * gamma + beta

    # Fold in the nn.Embedding (policy-id) lookups: decode ids, build one
    # int32-compare one-hot over all policy slices, one matmul adds the rows.
    # TODO(synk): if e_total / #policy-slices grows, switch to a scalar-
    # prefetched row gather instead of the VMEM-resident one-hot matmul.
    if pol_slices:
        tb = x.shape[0]
        iota = jax.lax.broadcasted_iota(jnp.int32, (tb, e_rows), 1)
        onehot = jnp.zeros((tb, e_rows), jnp.float32)
        for col, n_emb, e_off, _g in pol_slices:
            t = x[:, col:col + 1]                                  # (TB, 1)
            # (t*n - 1).clip(0).round(); upper-clamp added for safety
            f = jnp.clip(t * float(n_emb) - 1.0, 0.0, float(n_emb - 1))
            idx = jnp.round(f).astype(jnp.int32) + e_off
            onehot = onehot + (iota == idx).astype(jnp.float32)
        out = out + jnp.dot(onehot.astype(wemb_ref.dtype), wemb_ref[...],
                            preferred_element_type=jnp.float32)

    o_ref[...] = out


# ---------------- forward ----------------

def _choose_tb(batch, total_in, c_out, weight_bytes):
    """Batch tile from a conservative VMEM budget (safe on v7x's 64 MiB)."""
    if batch <= 16:
        return batch
    budget = 24 << 20                       # leaves headroom below 32 MiB scoped
    per_row = 2 * 4 * (total_in + c_out)    # double-buffered f32 x / out tiles
    avail = max(budget - 2 * weight_bytes, per_row * 8)
    tb = min(512, avail // per_row)
    # v7x megacore: guarantee >= 2 grid steps so both TensorCores get work
    # (costs one extra ~0.35us grid step on single-TC v5e/v6e -> negligible).
    half = _round_up((batch + 1) // 2, 8)
    tb = min(tb, half)
    return int(max(8, (tb // 8) * 8))


def embedding_forward(packed, x, split_shape, cfg, self_idx=None):
    B = x.shape[0]
    total_in = cfg["total_in"]
    C = cfg["c_out"]
    G = cfg["g_cols"]
    D = cfg["d_model"]
    total_k = cfg["total_k"]
    use_p = cfg["use_p"]
    e_rows = max(cfg["e_total"], 1)

    # Operand order must match the kernel unpack: x, w_bd, bgb, [pmat], pool,
    # bcast, w_emb.
    weight_ops = [packed["w_bd"], packed["bgb"]]
    if use_p:
        weight_ops.append(packed["pmat"])
    weight_ops += [packed["pool"], packed["bcast"], packed["w_emb"]]
    weight_bytes = sum(int(a.size) * a.dtype.itemsize for a in weight_ops)

    tb = _choose_tb(B, total_in, C, weight_bytes)
    grid = (pl.cdiv(B, tb),)

    full2 = lambda i: (0, 0)
    in_specs = [pl.BlockSpec((tb, total_in), lambda i: (i, 0))]   # x rows
    in_specs.append(pl.BlockSpec((total_in, C), full2))           # W_bd
    in_specs.append(pl.BlockSpec((3, C), full2))                  # bias/g/b
    if use_p:
        in_specs.append(pl.BlockSpec((C, C), full2))              # P
    in_specs.append(pl.BlockSpec((C, G), full2))                  # pool
    in_specs.append(pl.BlockSpec((G, C), full2))                  # bcast
    in_specs.append(pl.BlockSpec((e_rows, C), full2))             # tables

    # Explicit VMEM limit: double-buffered x/out tiles + double-buffered
    # constant slabs + headroom (v5e default scoped limit is only 16 MiB).
    vmem_need = 2 * tb * (total_in + C) * 4 + 2 * weight_bytes
    vmem_limit = int(min(max(4 * vmem_need, 32 << 20), 64 << 20))

    flops = (2 * B * total_in * C          # block-diagonal linear
             + 2 * B * C * G               # var pooling
             + 2 * B * G * C               # inv broadcast
             + 2 * B * e_rows * C)         # policy one-hot matmul
    flops += 2 * B * C * C if use_p else 2 * B * (C * G + G * C)   # mean
    cost = pl.CostEstimate(
        flops=int(flops),
        transcendentals=int(B * G),
        bytes_accessed=int(B * (total_in + C) * 4 + weight_bytes))

    kernel = functools.partial(_fused_embedding_kernel,
                               tuple(cfg["pol_slices"]), e_rows, use_p)

    y = pl.pallas_call(
        kernel,
        out_shape=jax.ShapeDtypeStruct((B, C), jnp.float32),
        grid=grid,
        in_specs=in_specs,
        out_specs=pl.BlockSpec((tb, C), lambda i: (i, 0)),
        compiler_params=pltpu.CompilerParams(
            dimension_semantics=("parallel",),
            vmem_limit_bytes=vmem_limit),
        cost_estimate=cost,
    )(x, *weight_ops)

    # (B, total_k*D) -> (B, total_k, D) is row-major compatible (no copy);
    # no post-kernel slice: the kernel writes exactly total_k*D lanes.
    out = y.reshape(B, total_k, D)                    # == torch.stack(x1, 1)
    if self_idx is None:
        return out, None
    return out, split_obs(x, split_shape)[self_idx]


# ---------------- pure-JAX reference (for correctness check) ----------------

def reference_forward(params, x, split_shape):
    pieces = split_obs(x, split_shape)
    outs = []
    for i, ss in enumerate(split_shape):
        K, L = ss[0], ss[1]
        p = params[f"fc_{i}"]
        for j in range(K):
            t = pieces[i][:, L * j:L * j + L]
            if _is_policy(ss):
                n = ss[3]
                idx = jnp.round(jnp.clip(t * n - 1.0, 0.0, n - 1.0))
                idx = idx.astype(jnp.int32)[:, 0]
                outs.append(p["table"][idx])
            else:
                h = jnp.dot(t, p["W"],
                            precision=jax.lax.Precision.HIGHEST) + p["b"]
                h = jnp.maximum(h, 0.0)
                m = jnp.mean(h, -1, keepdims=True)
                v = jnp.mean((h - m) ** 2, -1, keepdims=True)
                outs.append((h - m) * jax.lax.rsqrt(v + LN_EPS)
                            * p["gamma"] + p["beta"])
    return jnp.stack(outs, 1)


if __name__ == "__main__":
    # example config: two linear segments + one policy-id (embedding) segment
    split_shape = [(2, 16), (3, 8), (1, 1, 0, 4)]
    d_model = 32
    B = 2
    total_K = sum(ss[0] for ss in split_shape)              # 6

    key = jax.random.PRNGKey(0)
    pkey, xkey, ikey = jax.random.split(key, 3)
    params = init_params(pkey, split_shape, d_model)
    cfg = build_config(split_shape, d_model)
    packed = pack_params(params, split_shape, cfg)

    # build input: random normal for linear segments, valid categorical
    # encoding ((idx+1)/n_embed) for the policy-id segment
    pieces = []
    for i, ss in enumerate(split_shape):
        K, L = ss[0], ss[1]
        if _is_policy(ss):
            n_embed = ss[3]
            idx = jax.random.randint(ikey, (B, K * L), 0, n_embed)
            pieces.append((idx.astype(jnp.float32) + 1.0) / float(n_embed))
        else:
            xkey, sub = jax.random.split(xkey)
            pieces.append(jax.random.normal(sub, (B, K * L), jnp.float32))
    x = jnp.concatenate(pieces, axis=1)                     # (2, 57)

    out, _ = embedding_forward(packed, x, split_shape, cfg, self_idx=None)
    out = jax.block_until_ready(out)
    assert out.shape == (B, total_K, d_model), out.shape
    assert out.dtype == jnp.float32

    ref = reference_forward(params, x, split_shape)
    err = float(jnp.max(jnp.abs(out - ref)))
    # Tolerance accounts for bf16 weight-slab storage vs the f32 HIGHEST-
    # precision reference (measured error is ~1e-2 worst case at these shapes).
    assert err < 5e-2, f"max abs err vs reference: {err}"
    print("KERNEL_OK")
</pallas_src>

<mosaic_0001>
module attributes {stable_mosaic.version = 11 : i64} {
  func.func @_fused_embedding_kernel(%arg0: i32, %arg1: memref<2x57xf32, #tpu.memory_space<vmem>>, %arg2: memref<57x192xbf16, #tpu.memory_space<vmem>>, %arg3: memref<3x192xf32, #tpu.memory_space<vmem>>, %arg4: memref<192x192xf32, #tpu.memory_space<vmem>>, %arg5: memref<192x128xf32, #tpu.memory_space<vmem>>, %arg6: memref<128x192xf32, #tpu.memory_space<vmem>>, %arg7: memref<4x192xbf16, #tpu.memory_space<vmem>>, %arg8: memref<2x192xf32, #tpu.memory_space<vmem>>) attributes {dimension_semantics = [#tpu.dimension_semantics<parallel>], iteration_bounds = array<i64: 1>, scalar_prefetch = 0 : i64, scratch_operands = 0 : i64, tpu.core_type = #tpu.core_type<tc>, window_params = [{transform_indices = @transform_0, window_bounds = array<i64: 2, 57>}, {pipeline_mode = #tpu.pipeline_mode<synchronous>, transform_indices = @transform_1, window_bounds = array<i64: 57, 192>}, {pipeline_mode = #tpu.pipeline_mode<synchronous>, transform_indices = @transform_2, window_bounds = array<i64: 3, 192>}, {pipeline_mode = #tpu.pipeline_mode<synchronous>, transform_indices = @transform_3, window_bounds = array<i64: 192, 192>}, {pipeline_mode = #tpu.pipeline_mode<synchronous>, transform_indices = @transform_4, window_bounds = array<i64: 192, 128>}, {pipeline_mode = #tpu.pipeline_mode<synchronous>, transform_indices = @transform_5, window_bounds = array<i64: 128, 192>}, {pipeline_mode = #tpu.pipeline_mode<synchronous>, transform_indices = @transform_6, window_bounds = array<i64: 4, 192>}, {transform_indices = @transform_7, window_bounds = array<i64: 2, 192>}]} {
    %c0 = arith.constant 0 : index
    %c0_0 = arith.constant 0 : index
    %0 = vector.load %arg1[%c0, %c0_0] : memref<2x57xf32, #tpu.memory_space<vmem>>, vector<2x57xf32>
    %c0_1 = arith.constant 0 : index
    %c0_2 = arith.constant 0 : index
    %1 = vector.load %arg3[%c0_1, %c0_2] : memref<3x192xf32, #tpu.memory_space<vmem>>, vector<3x192xf32>
    %2 = vector.extract_strided_slice %1 {offsets = [0, 0], sizes = [1, 192], strides = [1, 1]} : vector<3x192xf32> to vector<1x192xf32>
    %3 = vector.extract_strided_slice %1 {offsets = [1, 0], sizes = [1, 192], strides = [1, 1]} : vector<3x192xf32> to vector<1x192xf32>
    %4 = vector.extract_strided_slice %1 {offsets = [2, 0], sizes = [1, 192], strides = [1, 1]} : vector<3x192xf32> to vector<1x192xf32>
    %5 = arith.truncf %0 : vector<2x57xf32> to vector<2x57xbf16>
    %c0_3 = arith.constant 0 : index
    %c0_4 = arith.constant 0 : index
    %6 = vector.load %arg2[%c0_3, %c0_4] : memref<57x192xbf16, #tpu.memory_space<vmem>>, vector<57x192xbf16>
    %cst = arith.constant dense<0.000000e+00> : vector<2x192xf32>
    %7 = tpu.matmul %5, %6, %cst {dimension_numbers = #tpu.dot_dimension_numbers<[1], [0], [0], [1], [0, 0, 1, 1], [], []>} : vector<2x57xbf16>, vector<57x192xbf16>, vector<2x192xf32> -> vector<2x192xf32>
    %8 = vector.broadcast %2 : vector<1x192xf32> to vector<2x192xf32>
    %9 = arith.addf %7, %8 : vector<2x192xf32>
    %cst_5 = arith.constant 0.000000e+00 : f32
    %10 = vector.broadcast %cst_5 : f32 to vector<2x192xf32>
    %11 = arith.maximumf %9, %10 : vector<2x192xf32>
    %c0_6 = arith.constant 0 : index
    %c0_7 = arith.constant 0 : index
    %12 = vector.load %arg4[%c0_6, %c0_7] : memref<192x192xf32, #tpu.memory_space<vmem>>, vector<192x192xf32>
    %cst_8 = arith.constant dense<0.000000e+00> : vector<2x192xf32>
    %13 = tpu.matmul %11, %12, %cst_8 {dimension_numbers = #tpu.dot_dimension_numbers<[1], [0], [0], [1], [0, 0, 1, 1], [], []>} : vector<2x192xf32>, vector<192x192xf32>, vector<2x192xf32> -> vector<2x192xf32>
    %14 = arith.subf %11, %13 : vector<2x192xf32>
    %15 = arith.mulf %14, %14 : vector<2x192xf32>
    %c0_9 = arith.constant 0 : index
    %c0_10 = arith.constant 0 : index
    %16 = vector.load %arg5[%c0_9, %c0_10] : memref<192x128xf32, #tpu.memory_space<vmem>>, vector<192x128xf32>
    %cst_11 = arith.constant dense<0.000000e+00> : vector<2x128xf32>
    %17 = tpu.matmul %15, %16, %cst_11 {dimension_numbers = #tpu.dot_dimension_numbers<[1], [0], [0], [1], [0, 0, 1, 1], [], []>} : vector<2x192xf32>, vector<192x128xf32>, vector<2x128xf32> -> vector<2x128xf32>
    %cst_12 = arith.constant 9.99999974E-6 : f32
    %18 = vector.broadcast %cst_12 : f32 to vector<2x128xf32>
    %19 = arith.addf %17, %18 : vector<2x128xf32>
    %20 = math.rsqrt %19 : vector<2x128xf32>
    %c0_13 = arith.constant 0 : index
    %c0_14 = arith.constant 0 : index
    %21 = vector.load %arg6[%c0_13, %c0_14] : memref<128x192xf32, #tpu.memory_space<vmem>>, vector<128x192xf32>
    %cst_15 = arith.constant dense<0.000000e+00> : vector<2x192xf32>
    %22 = tpu.matmul %20, %21, %cst_15 {dimension_numbers = #tpu.dot_dimension_numbers<[1], [0], [0], [1], [0, 0, 1, 1], [], []>} : vector<2x128xf32>, vector<128x192xf32>, vector<2x192xf32> -> vector<2x192xf32>
    %23 = arith.mulf %14, %22 : vector<2x192xf32>
    %24 = vector.broadcast %3 : vector<1x192xf32> to vector<2x192xf32>
    %25 = arith.mulf %23, %24 : vector<2x192xf32>
    %26 = vector.broadcast %4 : vector<1x192xf32> to vector<2x192xf32>
    %27 = arith.addf %25, %26 : vector<2x192xf32>
    %28 = tpu.iota {dimensions = array<i32: 1>} : vector<2x4xi32>
    %cst_16 = arith.constant 0.000000e+00 : f32
    %29 = vector.broadcast %cst_16 : f32 to vector<2x4xf32>
    %30 = vector.extract_strided_slice %0 {offsets = [0, 56], sizes = [2, 1], strides = [1, 1]} : vector<2x57xf32> to vector<2x1xf32>
    %cst_17 = arith.constant 4.000000e+00 : f32
    %31 = vector.broadcast %cst_17 : f32 to vector<2x1xf32>
    %32 = arith.mulf %30, %31 : vector<2x1xf32>
    %cst_18 = arith.constant 1.000000e+00 : f32
    %33 = vector.broadcast %cst_18 : f32 to vector<2x1xf32>
    %34 = arith.subf %32, %33 : vector<2x1xf32>
    %cst_19 = arith.constant 0.000000e+00 : f32
    %cst_20 = arith.constant 3.000000e+00 : f32
    %35 = vector.broadcast %cst_19 : f32 to vector<2x1xf32>
    %36 = arith.maximumf %35, %34 : vector<2x1xf32>
    %37 = vector.broadcast %cst_20 : f32 to vector<2x1xf32>
    %38 = arith.minimumf %37, %36 : vector<2x1xf32>
    %39 = math.roundeven %38 : vector<2x1xf32>
    %40 = arith.fptosi %39 : vector<2x1xf32> to vector<2x1xi32>
    %c0_i32 = arith.constant 0 : i32
    %41 = vector.broadcast %c0_i32 : i32 to vector<2x1xi32>
    %42 = arith.addi %40, %41 : vector<2x1xi32>
    %43 = vector.broadcast %42 : vector<2x1xi32> to vector<2x4xi32>
    %44 = arith.cmpi eq, %28, %43 : vector<2x4xi32>
    %45 = arith.extui %44 : vector<2x4xi1> to vector<2x4xi32>
    %46 = arith.sitofp %45 : vector<2x4xi32> to vector<2x4xf32>
    %47 = arith.addf %29, %46 : vector<2x4xf32>
    %48 = arith.truncf %47 : vector<2x4xf32> to vector<2x4xbf16>
    %c0_21 = arith.constant 0 : index
    %c0_22 = arith.constant 0 : index
    %49 = vector.load %arg7[%c0_21, %c0_22] : memref<4x192xbf16, #tpu.memory_space<vmem>>, vector<4x192xbf16>
    %cst_23 = arith.constant dense<0.000000e+00> : vector<2x192xf32>
    %50 = tpu.matmul %48, %49, %cst_23 {dimension_numbers = #tpu.dot_dimension_numbers<[1], [0], [0], [1], [0, 0, 1, 1], [], []>} : vector<2x4xbf16>, vector<4x192xbf16>, vector<2x192xf32> -> vector<2x192xf32>
    %51 = arith.addf %27, %50 : vector<2x192xf32>
    %c0_24 = arith.constant 0 : index
    %c0_25 = arith.constant 0 : index
    %52 = vector.load %arg8[%c0_24, %c0_25] : memref<2x192xf32, #tpu.memory_space<vmem>>, vector<2x192xf32>
    tpu.vector_store %arg8[%c0_24, %c0_25], %51 {strides = array<i32>} : memref<2x192xf32, #tpu.memory_space<vmem>>, vector<2x192xf32>,
    return
  }
  func.func @transform_0(%arg0: i32) -> (i32, i32) {
    %c0_i32 = arith.constant 0 : i32
    %c0_i32_0 = arith.constant 0 : i32
    return %arg0, %c0_i32 : i32, i32
  }
  func.func @transform_1(%arg0: i32) -> (i32, i32) {
    %c0_i32 = arith.constant 0 : i32
    %c0_i32_0 = arith.constant 0 : i32
    %c0_i32_1 = arith.constant 0 : i32
    return %c0_i32, %c0_i32_0 : i32, i32
  }
  func.func @transform_2(%arg0: i32) -> (i32, i32) {
    %c0_i32 = arith.constant 0 : i32
    %c0_i32_0 = arith.constant 0 : i32
    %c0_i32_1 = arith.constant 0 : i32
    return %c0_i32, %c0_i32_0 : i32, i32
  }
  func.func @transform_3(%arg0: i32) -> (i32, i32) {
    %c0_i32 = arith.constant 0 : i32
    %c0_i32_0 = arith.constant 0 : i32
    %c0_i32_1 = arith.constant 0 : i32
    return %c0_i32, %c0_i32_0 : i32, i32
  }
  func.func @transform_4(%arg0: i32) -> (i32, i32) {
    %c0_i32 = arith.constant 0 : i32
    %c0_i32_0 = arith.constant 0 : i32
    %c0_i32_1 = arith.constant 0 : i32
    return %c0_i32, %c0_i32_0 : i32, i32
  }
  func.func @transform_5(%arg0: i32) -> (i32, i32) {
    %c0_i32 = arith.constant 0 : i32
    %c0_i32_0 = arith.constant 0 : i32
    %c0_i32_1 = arith.constant 0 : i32
    return %c0_i32, %c0_i32_0 : i32, i32
  }
  func.func @transform_6(%arg0: i32) -> (i32, i32) {
    %c0_i32 = arith.constant 0 : i32
    %c0_i32_0 = arith.constant 0 : i32
    %c0_i32_1 = arith.constant 0 : i32
    return %c0_i32, %c0_i32_0 : i32, i32
  }
  func.func @transform_7(%arg0: i32) -> (i32, i32) {
    %c0_i32 = arith.constant 0 : i32
    %c0_i32_0 = arith.constant 0 : i32
    return %arg0, %c0_i32 : i32, i32
  }
}

</mosaic_0001>

<llo_original>
// kernel: tpu_custom_call.1
$region0: #{tpu_custom_call.1}
  #allocation0 [shape = 'u32[]', space=smem, size = 0x4, offset = 0x4, fixed_abs, tag = 'smem constant byte address 0x4 - core index']
  #allocation1 [shape = 'u32[144,128]{1,0:T(1,128)}', space=vmem, size = 0x12000, scoped, tag = 'internal scratch']
  %s0 = inlined_call_operand.vmem [shape: f32[2,57], index: 0, kind: input, shape index: {}]
  %s1 = inlined_call_operand.vmem [shape: bf16[57,192], index: 1, kind: input, shape index: {}]
  %s2 = inlined_call_operand.vmem [shape: f32[3,192], index: 2, kind: input, shape index: {}]
  %s3 = inlined_call_operand.vmem [shape: f32[192,192], index: 3, kind: input, shape index: {}]
  %s4 = inlined_call_operand.hbm [shape: f32[192,128], index: 4, kind: input, shape index: {}]
  %s5 = inlined_call_operand.vmem [shape: f32[128,192], index: 5, kind: input, shape index: {}]
  %s6 = inlined_call_operand.vmem [shape: bf16[4,192], index: 6, kind: input, shape index: {}]
  %s7 = inlined_call_operand.hbm [shape: f32[2,192], index: 7, kind: output, shape index: {}]
  %s8 = sld [smem:[#allocation0]]
  $region42: #{tpu_custom_call.1} parent=0
    _
  %s10 = ssub.s32 1, %s8
  %s11 = scalar_select 0, %s10, %s8
  $region1: #{tpu_custom_call.1} parent=0
    #allocation2 [shape = 'u8[98304]{0}', space=vmem, size = 0x18000, scoped, tag = 'input window, operand 4, single buffered']
    #allocation3 [shape = 's32[1]{0}', space=sflag, size = 0x4, scoped, tag = 'scoped memory for tpu_custom_call.1']
    #allocation4 [shape = 's32[1]{0}', space=sflag, size = 0x4, scoped, tag = 'scoped memory for tpu_custom_call.1']
    #allocation5 [shape = 'u8[2048]{0}', space=vmem, size = 0x800, scoped, tag = 'output window, operand 0, single buffered']
    %12 = vsyncpa [#allocation3], 0
    %13 = vsyncpa [#allocation4], 0
    // Predicated region
    $region2: #{tpu_custom_call.1} parent=1 // pred_check
      _
    $region3: #{tpu_custom_call.1} parent=1 // pred_check_branch
      %15 = sbr.rel (0) target = $region5
    $region4: #{tpu_custom_call.1} parent=1 // pred_region
      _
    $region5: #{tpu_custom_call.1} parent=1 // pred_fallthru
      _
    // Predicated region
    $region6: #{tpu_custom_call.1} parent=1 // pred_check
      _
    $region7: #{tpu_custom_call.1} parent=1 // pred_check_branch
      %17 = sbr.rel (0) target = $region9
    $region8: #{tpu_custom_call.1} parent=1 // pred_region
      _
    $region9: #{tpu_custom_call.1} parent=1 // pred_fallthru
      _
    // Predicated region
    $region10: #{tpu_custom_call.1} parent=1 // pred_check
      _
    $region11: #{tpu_custom_call.1} parent=1 // pred_check_branch
      %19 = sbr.rel (0) target = $region13
    $region12: #{tpu_custom_call.1} parent=1 // pred_region
      _
    $region13: #{tpu_custom_call.1} parent=1 // pred_fallthru
      _
    // Predicated region
    $region14: #{tpu_custom_call.1} parent=1 // pred_check
      _
    $region15: #{tpu_custom_call.1} parent=1 // pred_check_branch
      %21 = sbr.rel (0) target = $region17
    $region16: #{tpu_custom_call.1} parent=1 // pred_region
      _
    $region17: #{tpu_custom_call.1} parent=1 // pred_fallthru
      _
    // Predicated region
    $region18: #{tpu_custom_call.1} parent=1 // pred_check
      _
    $region19: #{tpu_custom_call.1} parent=1 // pred_check_branch
      %23 = sbr.rel (0) target = $region21
    $region20: #{tpu_custom_call.1} parent=1 // pred_region
      %s25 = ssub.s32 3072, 3072
      %26 = vsyncadd [#allocation3], %s25
      %s27 = sshll.u32 [#allocation2], 4
      %s28 = int_to_ptr.vmem [resolvable:$true] %s27
      %33 = dma.hbm_to_vmem [thread:$0]  %s4, 3072, %s28, [#allocation3], 128, 128, 8
    $region21: #{tpu_custom_call.1} parent=1 // pred_fallthru
      _
    // Predicated region
    $region22: #{tpu_custom_call.1} parent=1 // pred_check
      _
    $region23: #{tpu_custom_call.1} parent=1 // pred_check_branch
      %35 = sbr.rel (0) target = $region25
    $region24: #{tpu_custom_call.1} parent=1 // pred_region
      _
    $region25: #{tpu_custom_call.1} parent=1 // pred_fallthru
      _
    // Predicated region
    $region26: #{tpu_custom_call.1} parent=1 // pred_check
      _
    $region27: #{tpu_custom_call.1} parent=1 // pred_check_branch
      %37 = sbr.rel (0) target = $region29
    $region28: #{tpu_custom_call.1} parent=1 // pred_region
      _
    $region29: #{tpu_custom_call.1} parent=1 // pred_fallthru
      _
    // Predicated region
    $region30: #{tpu_custom_call.1} parent=1 // pred_check
      _
    $region31: #{tpu_custom_call.1} parent=1 // pred_check_branch
      %39 = sbr.rel (0) target = $region33
    $region32: #{tpu_custom_call.1} parent=1 // pred_region
      %40 = dma.done [#allocation3], 3072
    $region33: #{tpu_custom_call.1} parent=1 // pred_fallthru
      _
    %v42 = vld [vmem:[%s0] sm:$0x3]
    %v43 = vld [vmem:[%s2] sm:$0x77]
    %v44 = vpack.c.bf16 %v42, %v42
    %v45 = vld [vmem:[%s1] sm:$0xff]
    %v46 = vld [vmem:[%s1 + $0x8] sm:$0xff]
    %v47 = vld [vmem:[%s1 + $0x10] sm:$0xff]
    %v48 = vld [vmem:[%s1 + $0x18] sm:$0xff]
    %v49 = vld [vmem:[%s1 + $0x20] sm:$0xff]
    %v50 = vld [vmem:[%s1 + $0x28] sm:$0xff]
    %v51 = vld [vmem:[%s1 + $0x30] sm:$0xff]
    %v52 = vld [vmem:[%s1 + $0x38] sm:$0x11]
    %v54 = vlaneseq
    %v55 = vshrl.u32 %v54, 7
    %v56 = vsub.s32 0, %v55
    %v57 = vrot.slane %v43, %v56
    %v58 = vlaneseq
    %v59 = vshrl.u32 %v58, 7
    %v60 = vsub.s32 4, %v59
    %v61 = vrot.slane %v43, %v60
    %v64 = vlaneseq
    %v65 = vshrl.u32 %v64, 7
    %v66 = vsub.s32 0, %v65
    %v67 = vrot.slane %v57, %v66
    %v68 = vlaneseq
    %v69 = vshrl.u32 %v68, 7
    %v70 = vsub.s32 0, %v69
    %v71 = vrot.slane %v61, %v70
    %v80 = vunpack.c.l.b16 %v45
    %v81 = vunpack.c.h.b16 %v45
    %v82 = vunpack.c.l.b16 %v46
    %v83 = vunpack.c.h.b16 %v46
    %v84 = vunpack.c.l.b16 %v47
    %v85 = vunpack.c.h.b16 %v47
    %v86 = vunpack.c.l.b16 %v48
    %v87 = vunpack.c.h.b16 %v48
    %v88 = vunpack.c.l.b16 %v49
    %v89 = vunpack.c.h.b16 %v49
    %v90 = vunpack.c.l.b16 %v50
    %v91 = vunpack.c.h.b16 %v50
    %v92 = vunpack.c.l.b16 %v51
    %v93 = vunpack.c.h.b16 %v51
    %v94 = vunpack.c.l.b16 %v52
    %v95 = vunpack.c.h.b16 %v52
    %v96 = vpack.c.b16 %v82, %v80
    %v97 = vpack.c.b16 %v83, %v81
    %v98 = vpack.c.b16 %v86, %v84
    %v99 = vpack.c.b16 %v87, %v85
    %v100 = vpack.c.b16 %v90, %v88
    %v101 = vpack.c.b16 %v91, %v89
    %v102 = vpack.c.b16 %v94, %v92
    %v103 = vpack.c.b16 %v95, %v93
    %vm110 = vcmask 465920
    %v112 = vsel %vm110, %v44, 0
    %vm114 = vcmask 1043456
    %vm115 = vcmask 1044480
    %v116 = vsel %vm114, 4294967295, 65535
    %v117 = vsel %vm115, %v116, 0
    %v119 = vand.u32 %v102, %v117
    %v122 = vand.u32 %v103, %v117
    %124 = vmatprep.subr.bf16.mxu0 %v97
    %125 = vmatpush1.bf16.msra.mxu0 %v96
    %126 = vmatprep.subr.bf16.mxu0 %v99
    %127 = vmatpush1.bf16.msra.mxu0 %v98
    %128 = vmatprep.subr.bf16.mxu0 %v101
    %129 = vmatpush1.bf16.msra.mxu0 %v100
    %130 = vmatprep.subr.bf16.mxu0 %v122
    %131 = vmatpush1.bf16.msra.mxu0 %v119
    %132 = vmatprep.subr.bf16.mxu0 0
    %133 = vmatpush1.bf16.msra.mxu0 0
    %134 = vmatprep.subr.bf16.mxu0 0
    %135 = vmatpush1.bf16.msra.mxu0 0
    %136 = vmatprep.subr.bf16.mxu0 0
    %137 = vmatpush1.bf16.msra.mxu0 0
    %138 = vmatprep.subr.bf16.mxu0 0
    %139 = vmatpush1.bf16.msra.mxu0 0
    %140 = vmatprep.subr.bf16.mxu0 0
    %141 = vmatpush1.bf16.msra.mxu0 0
    %142 = vmatprep.subr.bf16.mxu0 0
    %143 = vmatpush1.bf16.msra.mxu0 0
    %144 = vmatprep.subr.bf16.mxu0 0
    %145 = vmatpush1.bf16.msra.mxu0 0
    %146 = vmatprep.subr.bf16.mxu0 0
    %147 = vmatpush1.bf16.msra.mxu0 0
    %148 = vmatprep.subr.bf16.mxu0 0
    %149 = vmatpush1.bf16.msra.mxu0 0
    %150 = vmatprep.subr.bf16.mxu0 0
    %151 = vmatpush1.bf16.msra.mxu0 0
    %152 = vmatprep.subr.bf16.mxu0 0
    %153 = vmatpush1.bf16.msra.mxu0 0
    %154 = vmatprep.subr.bf16.mxu0 0
    %155 = vmatpush1.bf16.msra.mxu0 0
    %156 = vmatprep.mubr.bf16.mxu0 0
    %157 = vmatmul.mubr.bf16.gmra.mrb[0].mxu0 %v112
    %v158 = vpop.f32.mrb[0].mxu0
    %v159 = vadd.f32 %v67, %v158
    %v160 = vpop.f32.mrb[0].mxu0
    %v161 = vadd.f32 %v71, %v160
    %v162 = vpop.f32.mrb[0].mxu0
    %v163 = vpop.f32.mrb[0].mxu0
    %164 = vdwg.mxu0
    %v165 = vmax.f32 %v159, 0.0
    %v166 = vmax.f32 %v161, 0.0
    %v167 = vld [vmem:[%s3] sm:$0xff]
    %v168 = vld [vmem:[%s3 + $0x8] sm:$0xff]
    %v169 = vld [vmem:[%s3 + $0x10] sm:$0xff]
    %v170 = vld [vmem:[%s3 + $0x18] sm:$0xff]
    %v171 = vld [vmem:[%s3 + $0x20] sm:$0xff]
    %v172 = vld [vmem:[%s3 + $0x28] sm:$0xff]
    %v173 = vld [vmem:[%s3 + $0x30] sm:$0xff]
    %v174 = vld [vmem:[%s3 + $0x38] sm:$0xff]
    %v175 = vld [vmem:[%s3 + $0x40] sm:$0xff]
    %v176 = vld [vmem:[%s3 + $0x48] sm:$0xff]
    %v177 = vld [vmem:[%s3 + $0x50] sm:$0xff]
    %v178 = vld [vmem:[%s3 + $0x58] sm:$0xff]
    %v179 = vld [vmem:[%s3 + $0x60] sm:$0xff]
    %v180 = vld [vmem:[%s3 + $0x68] sm:$0xff]
    %v181 = vld [vmem:[%s3 + $0x70] sm:$0xff]
    %v182 = vld [vmem:[%s3 + $0x78] sm:$0xff]
    %v183 = vld [vmem:[%s3 + $0x80] sm:$0xff]
    %v184 = vld [vmem:[%s3 + $0x88] sm:$0xff]
    %v185 = vld [vmem:[%s3 + $0x90] sm:$0xff]
    %v186 = vld [vmem:[%s3 + $0x98] sm:$0xff]
    %v187 = vld [vmem:[%s3 + $0xa0] sm:$0xff]
    %v188 = vld [vmem:[%s3 + $0xa8] sm:$0xff]
    %v189 = vld [vmem:[%s3 + $0xb0] sm:$0xff]
    %v190 = vld [vmem:[%s3 + $0xb8] sm:$0xff]
    %v191 = vld [vmem:[%s3 + $0xc0] sm:$0xff]
    %v192 = vld [vmem:[%s3 + $0xc8] sm:$0xff]
    %v193 = vld [vmem:[%s3 + $0xd0] sm:$0xff]
    %v194 = vld [vmem:[%s3 + $0xd8] sm:$0xff]
    %v195 = vld [vmem:[%s3 + $0xe0] sm:$0xff]
    %v196 = vld [vmem:[%s3 + $0xe8] sm:$0xff]
    %v197 = vld [vmem:[%s3 + $0xf0] sm:$0xff]
    %v198 = vld [vmem:[%s3 + $0xf8] sm:$0xff]
    %v199 = vld [vmem:[%s3 + $0x100] sm:$0xff]
    %v200 = vld [vmem:[%s3 + $0x108] sm:$0xff]
    %v201 = vld [vmem:[%s3 + $0x110] sm:$0xff]
    %v202 = vld [vmem:[%s3 + $0x118] sm:$0xff]
    %v203 = vld [vmem:[%s3 + $0x120] sm:$0xff]
    %v204 = vld [vmem:[%s3 + $0x128] sm:$0xff]
    %v205 = vld [vmem:[%s3 + $0x130] sm:$0xff]
    %v206 = vld [vmem:[%s3 + $0x138] sm:$0xff]
    %v207 = vld [vmem:[%s3 + $0x140] sm:$0xff]
    %v208 = vld [vmem:[%s3 + $0x148] sm:$0xff]
    %v209 = vld [vmem:[%s3 + $0x150] sm:$0xff]
    %v210 = vld [vmem:[%s3 + $0x158] sm:$0xff]
    %v211 = vld [vmem:[%s3 + $0x160] sm:$0xff]
    %v212 = vld [vmem:[%s3 + $0x168] sm:$0xff]
    %v213 = vld [vmem:[%s3 + $0x170] sm:$0xff]
    %v214 = vld [vmem:[%s3 + $0x178] sm:$0xff]
    %vm215 = vcmask 523264
    %v217 = vsel %vm215, %v166, 0
    %219 = vmatprep.subr.mxu0 %v168
    %220 = vmatpush1.msra.mxu0 %v167
    %221 = vmatprep.subr.mxu0 %v170
    %222 = vmatpush1.msra.mxu0 %v169
    %223 = vmatprep.subr.mxu0 %v172
    %224 = vmatpush1.msra.mxu0 %v171
    %225 = vmatprep.subr.mxu0 %v174
    %226 = vmatpush1.msra.mxu0 %v173
    %227 = vmatprep.subr.mxu0 %v176
    %228 = vmatpush1.msra.mxu0 %v175
    %229 = vmatprep.subr.mxu0 %v178
    %230 = vmatpush1.msra.mxu0 %v177
    %231 = vmatprep.subr.mxu0 %v180
    %232 = vmatpush1.msra.mxu0 %v179
    %233 = vmatprep.subr.mxu0 %v182
    %234 = vmatpush1.msra.mxu0 %v181
    %235 = vmatprep.subr.mxu0 %v184
    %236 = vmatpush1.msra.mxu0 %v183
    %237 = vmatprep.subr.mxu0 %v186
    %238 = vmatpush1.msra.mxu0 %v185
    %239 = vmatprep.subr.mxu0 %v188
    %240 = vmatpush1.msra.mxu0 %v187
    %241 = vmatprep.subr.mxu0 %v190
    %242 = vmatpush1.msra.mxu0 %v189
    %243 = vmatprep.subr.mxu0 %v192
    %244 = vmatpush1.msra.mxu0 %v191
    %245 = vmatprep.subr.mxu0 %v194
    %246 = vmatpush1.msra.mxu0 %v193
    %247 = vmatprep.subr.mxu0 %v196
    %248 = vmatpush1.msra.mxu0 %v195
    %249 = vmatprep.subr.mxu0 %v198
    %250 = vmatpush1.msra.mxu0 %v197
    %251 = vmatprep.subr.mxu0 %v200
    %252 = vmatpush1.msra.mxu0 %v199
    %253 = vmatprep.subr.mxu0 %v202
    %254 = vmatpush1.msra.mxu0 %v201
    %255 = vmatprep.subr.mxu0 %v204
    %256 = vmatpush1.msra.mxu0 %v203
    %257 = vmatprep.subr.mxu0 %v206
    %258 = vmatpush1.msra.mxu0 %v205
    %259 = vmatprep.subr.mxu0 %v208
    %260 = vmatpush1.msra.mxu0 %v207
    %261 = vmatprep.subr.mxu0 %v210
    %262 = vmatpush1.msra.mxu0 %v209
    %263 = vmatprep.subr.mxu0 %v212
    %264 = vmatpush1.msra.mxu0 %v211
    %265 = vmatprep.subr.mxu0 %v214
    %266 = vmatpush1.msra.mxu0 %v213
    %267 = vmatprep.subr.mxu0 0.0
    %268 = vmatpush1.msra.mxu0 0.0
    %269 = vmatprep.subr.mxu0 0.0
    %270 = vmatpush1.msra.mxu0 0.0
    %271 = vmatprep.subr.mxu0 0.0
    %272 = vmatpush1.msra.mxu0 0.0
    %273 = vmatprep.subr.mxu0 0.0
    %274 = vmatpush1.msra.mxu0 0.0
    %275 = vmatprep.subr.mxu0 0.0
    %276 = vmatpush1.msra.mxu0 0.0
    %277 = vmatprep.subr.mxu0 0.0
    %278 = vmatpush1.msra.mxu0 0.0
    %279 = vmatprep.subr.mxu0 0.0
    %280 = vmatpush1.msra.mxu0 0.0
    %281 = vmatprep.subr.mxu0 0.0
    %282 = vmatpush1.msra.mxu0 0.0
    %283 = vmatprep.mubr.f32.mxu0 %v217
    %284 = vmatmul.mubr.f32.gmra.mrb[0].mxu0 %v165
    %v285 = vpop.f32.mrb[0].mxu0
    %v286 = vadd.f32 0.0, %v285
    %v287 = vpop.f32.mrb[0].mxu0
    %v288 = vadd.f32 0.0, %v287
    %289 = vdwg.mxu0
    %v290 = vsub.f32 %v165, %v286
    %v291 = vsub.f32 %v166, %v288
    %v292 = vmul.f32 %v290, %v290
    %v293 = vmul.f32 %v291, %v291
    %v294 = vld [vmem:[#allocation2] sm:$0xff]
    %v295 = vld [vmem:[#allocation2 + $0x8] sm:$0xff]
    %v296 = vld [vmem:[#allocation2 + $0x10] sm:$0xff]
    %v297 = vld [vmem:[#allocation2 + $0x18] sm:$0xff]
    %v298 = vld [vmem:[#allocation2 + $0x20] sm:$0xff]
    %v299 = vld [vmem:[#allocation2 + $0x28] sm:$0xff]
    %v300 = vld [vmem:[#allocation2 + $0x30] sm:$0xff]
    %v301 = vld [vmem:[#allocation2 + $0x38] sm:$0xff]
    %v302 = vld [vmem:[#allocation2 + $0x40] sm:$0xff]
    %v303 = vld [vmem:[#allocation2 + $0x48] sm:$0xff]
    %v304 = vld [vmem:[#allocation2 + $0x50] sm:$0xff]
    %v305 = vld [vmem:[#allocation2 + $0x58] sm:$0xff]
    %v306 = vld [vmem:[#allocation2 + $0x60] sm:$0xff]
    %v307 = vld [vmem:[#allocation2 + $0x68] sm:$0xff]
    %v308 = vld [vmem:[#allocation2 + $0x70] sm:$0xff]
    %v309 = vld [vmem:[#allocation2 + $0x78] sm:$0xff]
    %v310 = vld [vmem:[#allocation2 + $0x80] sm:$0xff]
    %v311 = vld [vmem:[#allocation2 + $0x88] sm:$0xff]
    %v312 = vld [vmem:[#allocation2 + $0x90] sm:$0xff]
    %v313 = vld [vmem:[#allocation2 + $0x98] sm:$0xff]
    %v314 = vld [vmem:[#allocation2 + $0xa0] sm:$0xff]
    %v315 = vld [vmem:[#allocation2 + $0xa8] sm:$0xff]
    %v316 = vld [vmem:[#allocation2 + $0xb0] sm:$0xff]
    %v317 = vld [vmem:[#allocation2 + $0xb8] sm:$0xff]
    %v319 = vsel %vm215, %v293, 0
    %321 = vmatprep.subr.mxu0 0.0
    %322 = vmatpush1.msra.mxu0 %v294
    %323 = vmatprep.subr.mxu0 0.0
    %324 = vmatpush1.msra.mxu0 %v295
    %325 = vmatprep.subr.mxu0 0.0
    %326 = vmatpush1.msra.mxu0 %v296
    %327 = vmatprep.subr.mxu0 0.0
    %328 = vmatpush1.msra.mxu0 %v297
    %329 = vmatprep.subr.mxu0 0.0
    %330 = vmatpush1.msra.mxu0 %v298
    %331 = vmatprep.subr.mxu0 0.0
    %332 = vmatpush1.msra.mxu0 %v299
    %333 = vmatprep.subr.mxu0 0.0
    %334 = vmatpush1.msra.mxu0 %v300
    %335 = vmatprep.subr.mxu0 0.0
    %336 = vmatpush1.msra.mxu0 %v301
    %337 = vmatprep.subr.mxu0 0.0
    %338 = vmatpush1.msra.mxu0 %v302
    %339 = vmatprep.subr.mxu0 0.0
    %340 = vmatpush1.msra.mxu0 %v303
    %341 = vmatprep.subr.mxu0 0.0
    %342 = vmatpush1.msra.mxu0 %v304
    %343 = vmatprep.subr.mxu0 0.0
    %344 = vmatpush1.msra.mxu0 %v305
    %345 = vmatprep.subr.mxu0 0.0
    %346 = vmatpush1.msra.mxu0 %v306
    %347 = vmatprep.subr.mxu0 0.0
    %348 = vmatpush1.msra.mxu0 %v307
    %349 = vmatprep.subr.mxu0 0.0
    %350 = vmatpush1.msra.mxu0 %v308
    %351 = vmatprep.subr.mxu0 0.0
    %352 = vmatpush1.msra.mxu0 %v309
    %353 = vmatprep.subr.mxu0 0.0
    %354 = vmatpush1.msra.mxu0 %v310
    %355 = vmatprep.subr.mxu0 0.0
    %356 = vmatpush1.msra.mxu0 %v311
    %357 = vmatprep.subr.mxu0 0.0
    %358 = vmatpush1.msra.mxu0 %v312
    %359 = vmatprep.subr.mxu0 0.0
    %360 = vmatpush1.msra.mxu0 %v313
    %361 = vmatprep.subr.mxu0 0.0
    %362 = vmatpush1.msra.mxu0 %v314
    %363 = vmatprep.subr.mxu0 0.0
    %364 = vmatpush1.msra.mxu0 %v315
    %365 = vmatprep.subr.mxu0 0.0
    %366 = vmatpush1.msra.mxu0 %v316
    %367 = vmatprep.subr.mxu0 0.0
    %368 = vmatpush1.msra.mxu0 %v317
    %369 = vmatprep.subr.mxu0 0.0
    %370 = vmatpush1.msra.mxu0 0.0
    %371 = vmatprep.subr.mxu0 0.0
    %372 = vmatpush1.msra.mxu0 0.0
    %373 = vmatprep.subr.mxu0 0.0
    %374 = vmatpush1.msra.mxu0 0.0
    %375 = vmatprep.subr.mxu0 0.0
    %376 = vmatpush1.msra.mxu0 0.0
    %377 = vmatprep.subr.mxu0 0.0
    %378 = vmatpush1.msra.mxu0 0.0
    %379 = vmatprep.subr.mxu0 0.0
    %380 = vmatpush1.msra.mxu0 0.0
    %381 = vmatprep.subr.mxu0 0.0
    %382 = vmatpush1.msra.mxu0 0.0
    %383 = vmatprep.subr.mxu0 0.0
    %384 = vmatpush1.msra.mxu0 0.0
    %385 = vmatprep.mubr.f32.mxu0 %v319
    %386 = vmatmul.mubr.f32.gmra.mrb[0].mxu0 %v292
    %v387 = vpop.f32.mrb[0].mxu0
    %v388 = vadd.f32 1e-05, %v387
    %v389 = vpop.f32.mrb[0].mxu0
    %390 = vdwg.mxu0
    %v391 = vrsqrt.pop %v388
    %v392 = vld [vmem:[%s5] sm:$0xff]
    %v393 = vld [vmem:[%s5 + $0x8] sm:$0xff]
    %v394 = vld [vmem:[%s5 + $0x10] sm:$0xff]
    %v395 = vld [vmem:[%s5 + $0x18] sm:$0xff]
    %v396 = vld [vmem:[%s5 + $0x20] sm:$0xff]
    %v397 = vld [vmem:[%s5 + $0x28] sm:$0xff]
    %v398 = vld [vmem:[%s5 + $0x30] sm:$0xff]
    %v399 = vld [vmem:[%s5 + $0x38] sm:$0xff]
    %v400 = vld [vmem:[%s5 + $0x40] sm:$0xff]
    %v401 = vld [vmem:[%s5 + $0x48] sm:$0xff]
    %v402 = vld [vmem:[%s5 + $0x50] sm:$0xff]
    %v403 = vld [vmem:[%s5 + $0x58] sm:$0xff]
    %v404 = vld [vmem:[%s5 + $0x60] sm:$0xff]
    %v405 = vld [vmem:[%s5 + $0x68] sm:$0xff]
    %v406 = vld [vmem:[%s5 + $0x70] sm:$0xff]
    %v407 = vld [vmem:[%s5 + $0x78] sm:$0xff]
    %v408 = vld [vmem:[%s5 + $0x80] sm:$0xff]
    %v409 = vld [vmem:[%s5 + $0x88] sm:$0xff]
    %v410 = vld [vmem:[%s5 + $0x90] sm:$0xff]
    %v411 = vld [vmem:[%s5 + $0x98] sm:$0xff]
    %v412 = vld [vmem:[%s5 + $0xa0] sm:$0xff]
    %v413 = vld [vmem:[%s5 + $0xa8] sm:$0xff]
    %v414 = vld [vmem:[%s5 + $0xb0] sm:$0xff]
    %v415 = vld [vmem:[%s5 + $0xb8] sm:$0xff]
    %v416 = vld [vmem:[%s5 + $0xc0] sm:$0xff]
    %v417 = vld [vmem:[%s5 + $0xc8] sm:$0xff]
    %v418 = vld [vmem:[%s5 + $0xd0] sm:$0xff]
    %v419 = vld [vmem:[%s5 + $0xd8] sm:$0xff]
    %v420 = vld [vmem:[%s5 + $0xe0] sm:$0xff]
    %v421 = vld [vmem:[%s5 + $0xe8] sm:$0xff]
    %v422 = vld [vmem:[%s5 + $0xf0] sm:$0xff]
    %v423 = vld [vmem:[%s5 + $0xf8] sm:$0xff]
    %424 = vmatprep.subr.mxu0 %v393
    %425 = vmatpush1.msra.mxu0 %v392
    %426 = vmatprep.subr.mxu0 %v395
    %427 = vmatpush1.msra.mxu0 %v394
    %428 = vmatprep.subr.mxu0 %v397
    %429 = vmatpush1.msra.mxu0 %v396
    %430 = vmatprep.subr.mxu0 %v399
    %431 = vmatpush1.msra.mxu0 %v398
    %432 = vmatprep.subr.mxu0 %v401
    %433 = vmatpush1.msra.mxu0 %v400
    %434 = vmatprep.subr.mxu0 %v403
    %435 = vmatpush1.msra.mxu0 %v402
    %436 = vmatprep.subr.mxu0 %v405
    %437 = vmatpush1.msra.mxu0 %v404
    %438 = vmatprep.subr.mxu0 %v407
    %439 = vmatpush1.msra.mxu0 %v406
    %440 = vmatprep.subr.mxu0 %v409
    %441 = vmatpush1.msra.mxu0 %v408
    %442 = vmatprep.subr.mxu0 %v411
    %443 = vmatpush1.msra.mxu0 %v410
    %444 = vmatprep.subr.mxu0 %v413
    %445 = vmatpush1.msra.mxu0 %v412
    %446 = vmatprep.subr.mxu0 %v415
    %447 = vmatpush1.msra.mxu0 %v414
    %448 = vmatprep.subr.mxu0 %v417
    %449 = vmatpush1.msra.mxu0 %v416
    %450 = vmatprep.subr.mxu0 %v419
    %451 = vmatpush1.msra.mxu0 %v418
    %452 = vmatprep.subr.mxu0 %v421
    %453 = vmatpush1.msra.mxu0 %v420
    %454 = vmatprep.subr.mxu0 %v423
    %455 = vmatpush1.msra.mxu0 %v422
    %456 = vmatprep.subr.mxu0 0.0
    %457 = vmatpush1.msra.mxu0 0.0
    %458 = vmatprep.subr.mxu0 0.0
    %459 = vmatpush1.msra.mxu0 0.0
    %460 = vmatprep.subr.mxu0 0.0
    %461 = vmatpush1.msra.mxu0 0.0
    %462 = vmatprep.subr.mxu0 0.0
    %463 = vmatpush1.msra.mxu0 0.0
    %464 = vmatprep.subr.mxu0 0.0
    %465 = vmatpush1.msra.mxu0 0.0
    %466 = vmatprep.subr.mxu0 0.0
    %467 = vmatpush1.msra.mxu0 0.0
    %468 = vmatprep.subr.mxu0 0.0
    %469 = vmatpush1.msra.mxu0 0.0
    %470 = vmatprep.subr.mxu0 0.0
    %471 = vmatpush1.msra.mxu0 0.0
    %472 = vmatprep.subr.mxu0 0.0
    %473 = vmatpush1.msra.mxu0 0.0
    %474 = vmatprep.subr.mxu0 0.0
    %475 = vmatpush1.msra.mxu0 0.0
    %476 = vmatprep.subr.mxu0 0.0
    %477 = vmatpush1.msra.mxu0 0.0
    %478 = vmatprep.subr.mxu0 0.0
    %479 = vmatpush1.msra.mxu0 0.0
    %480 = vmatprep.subr.mxu0 0.0
    %481 = vmatpush1.msra.mxu0 0.0
    %482 = vmatprep.subr.mxu0 0.0
    %483 = vmatpush1.msra.mxu0 0.0
    %484 = vmatprep.subr.mxu0 0.0
    %485 = vmatpush1.msra.mxu0 0.0
    %486 = vmatprep.subr.mxu0 0.0
    %487 = vmatpush1.msra.mxu0 0.0
    %488 = vmatprep.mubr.f32.mxu0 0.0
    %489 = vmatmul.mubr.f32.gmra.mrb[0].mxu0 %v391
    %v490 = vpop.f32.mrb[0].mxu0
    %v491 = vadd.f32 0.0, %v490
    %v492 = vpop.f32.mrb[0].mxu0
    %v493 = vadd.f32 0.0, %v492
    %494 = vdwg.mxu0
    %v495 = vmul.f32 %v290, %v491
    %v496 = vmul.f32 %v291, %v493
    %v497 = vlaneseq
    %v498 = vshrl.u32 %v497, 7
    %v499 = vsub.s32 1, %v498
    %v500 = vrot.slane %v43, %v499
    %v501 = vlaneseq
    %v502 = vshrl.u32 %v501, 7
    %v503 = vsub.s32 5, %v502
    %v504 = vrot.slane %v43, %v503
    %v507 = vlaneseq
    %v508 = vshrl.u32 %v507, 7
    %v509 = vsub.s32 1, %v508
    %v510 = vrot.slane %v500, %v509
    %v511 = vlaneseq
    %v512 = vshrl.u32 %v511, 7
    %v513 = vsub.s32 1, %v512
    %v514 = vrot.slane %v504, %v513
    %v515 = vmul.f32 %v495, %v510
    %v516 = vmul.f32 %v496, %v514
    %v517 = vlaneseq
    %v518 = vshrl.u32 %v517, 7
    %v519 = vsub.s32 2, %v518
    %v520 = vrot.slane %v43, %v519
    %v521 = vlaneseq
    %v522 = vshrl.u32 %v521, 7
    %v523 = vsub.s32 6, %v522
    %v524 = vrot.slane %v43, %v523
    %v527 = vlaneseq
    %v528 = vshrl.u32 %v527, 7
    %v529 = vsub.s32 2, %v528
    %v530 = vrot.slane %v520, %v529
    %v531 = vlaneseq
    %v532 = vshrl.u32 %v531, 7
    %v533 = vsub.s32 2, %v532
    %v534 = vrot.slane %v524, %v533
    %v535 = vadd.f32 %v515, %v530
    %v536 = vadd.f32 %v516, %v534
    %v537 = vlaneseq
    %v538 = vand.u32 %v537, 127
    %v539 = vmul.f32 %v42, 4.0
    %v540 = vsub.f32 %v539, 1.0
    %v541 = vmax.f32 %v540, 0.0
    %v542 = vmin.f32 %v541, 3.0
    %v543 = vcvt.f32.s32.ties.to.even %v542
    %544 = vset.pattern.permute.xlu0 56
    %545 = vperm.xlu0 %544, %v543
    %v546 = vpop.permute.xlu0 %545
    %vm547 = vcmp.eq.s32.totalorder %v538, %v546
    %v548 = vsel %vm547, 1, 0
    %v549 = vcvt.s32.f32 %v548
    %v550 = vadd.f32 %v549, 0.0
    %v551 = vpack.c.bf16 %v550, %v550
    %v552 = vld [vmem:[%s6] sm:$0xf]
    %v555 = vunpack.c.l.s4 1983009808
    %v556 = vunpack.c.0.s8 %v555
    %v557 = vlaneseq
    %v558 = vshrl.u32 %v557, 7
    %v559 = vsub.s32 %v556, %v558
    %v560 = vrot.slane %v552, %v559
    %v561 = vcombine.high %v560, %v560
    %vm562 = vcmask 31744
    %v564 = vsel %vm562, %v551, 0
    %vm566 = vcmask 1041408
    %v568 = vsel %vm566, %v560, 0
    %v571 = vsel %vm566, %v561, 0
    %573 = vmatprep.subr.bf16.mxu0 %v571
    %574 = vmatpush1.bf16.msra.mxu0 %v568
    %575 = vmatprep.subr.bf16.mxu0 0
    %576 = vmatpush1.bf16.msra.mxu0 0
    %577 = vmatprep.subr.bf16.mxu0 0
    %578 = vmatpush1.bf16.msra.mxu0 0
    %579 = vmatprep.subr.bf16.mxu0 0
    %580 = vmatpush1.bf16.msra.mxu0 0
    %581 = vmatprep.subr.bf16.mxu0 0
    %582 = vmatpush1.bf16.msra.mxu0 0
    %583 = vmatprep.subr.bf16.mxu0 0
    %584 = vmatpush1.bf16.msra.mxu0 0
    %585 = vmatprep.subr.bf16.mxu0 0
    %586 = vmatpush1.bf16.msra.mxu0 0
    %587 = vmatprep.subr.bf16.mxu0 0
    %588 = vmatpush1.bf16.msra.mxu0 0
    %589 = vmatprep.subr.bf16.mxu0 0
    %590 = vmatpush1.bf16.msra.mxu0 0
    %591 = vmatprep.subr.bf16.mxu0 0
    %592 = vmatpush1.bf16.msra.mxu0 0
    %593 = vmatprep.subr.bf16.mxu0 0
    %594 = vmatpush1.bf16.msra.mxu0 0
    %595 = vmatprep.subr.bf16.mxu0 0
    %596 = vmatpush1.bf16.msra.mxu0 0
    %597 = vmatprep.subr.bf16.mxu0 0
    %598 = vmatpush1.bf16.msra.mxu0 0
    %599 = vmatprep.subr.bf16.mxu0 0
    %600 = vmatpush1.bf16.msra.mxu0 0
    %601 = vmatprep.subr.bf16.mxu0 0
    %602 = vmatpush1.bf16.msra.mxu0 0
    %603 = vmatprep.subr.bf16.mxu0 0
    %604 = vmatpush1.bf16.msra.mxu0 0
    %605 = vmatprep.mubr.bf16.mxu0 0
    %606 = vmatmul.mubr.bf16.gmra.mrb[0].mxu0 %v564
    %v607 = vpop.f32.mrb[0].mxu0
    %v608 = vadd.f32 0.0, %v607
    %v609 = vpop.f32.mrb[0].mxu0
    %v610 = vadd.f32 0.0, %v609
    %v611 = vpop.f32.mrb[0].mxu0
    %v612 = vpop.f32.mrb[0].mxu0
    %613 = vdwg.mxu0
    %v614 = vadd.f32 %v535, %v608
    %v615 = vadd.f32 %v536, %v610
    %v618 = vcombine.low %v614, %v615
    %v620 = vunpack.c.l.s4 1983009808
    %v621 = vunpack.c.0.s8 %v620
    %v622 = vlaneseq
    %v623 = vshrl.u32 %v622, 7
    %v624 = vsub.s32 %v621, %v623
    %v625 = vrot.slane %v618, %v624
    %vm627 = vcmask 519170
    %vm628 = vmor %vm627, %vm566
    %629 = vst.msk [vmem:[#allocation5] sm:$0xf] %vm628, %v625
    // Predicated region
    $region34: #{tpu_custom_call.1} parent=1 // pred_check
      _
    $region35: #{tpu_custom_call.1} parent=1 // pred_check_branch
      %631 = sbr.rel (0) target = $region37
    $region36: #{tpu_custom_call.1} parent=1 // pred_region
      %s633 = ssub.s32 64, 64
      %634 = vsyncadd [#allocation4], %s633
      %s636 = sshll.u32 [#allocation5], 4
      %s637 = int_to_ptr.vmem [resolvable:$true] %s636
      %639 = dma.vmem_to_hbm [thread:$0]  %s637, 64, %s7, [#allocation4]
    $region37: #{tpu_custom_call.1} parent=1 // pred_fallthru
      _
    // Predicated region
    $region38: #{tpu_custom_call.1} parent=1 // pred_check
      _
    $region39: #{tpu_custom_call.1} parent=1 // pred_check_branch
      %641 = sbr.rel (0) target = $region41
    $region40: #{tpu_custom_call.1} parent=1 // pred_region
      %642 = dma.done [#allocation4], 64
    $region41: #{tpu_custom_call.1} parent=1 // pred_fallthru
      _
    %643 = vsyncpa [#allocation3], 1
    %644 = vsyncpa [#allocation4], 1

</llo_original>
